<compile_context>
chip_gen: v5e
topology: v5e:2x2
jax: 0.10.0
libtpu: 0.0.40
codegen_flags: <defaults>
</compile_context>

<pallas_src>
import functools

import jax
import jax.numpy as jnp
from jax.experimental import pallas as pl
from jax.experimental.pallas import tpu as pltpu


# ----------------------------- Pallas kernel ------------------------------

def _mna_pool_kernel(*refs, kernel_size, stride, lout):
    """Fused MaxPool1d + AvgPool1d on one (1, TC, *) channel tile.

    refs = (phase_0, ..., phase_{P-1}, out).  Phase p holds x[:, :, p::stride],
    so window element j of output position o is phase[j % stride][o + j//stride]
    -- a contiguous lane slice of data already in VMEM.
    Output block is (1, 2, TC, lout): slot 0 <- max pooling, slot 1 <- avg.
    """
    phase_refs, out_ref = refs[:-1], refs[-1]
    mx = None
    sm = None
    for j in range(kernel_size):
        p, q = j % stride, j // stride
        w = phase_refs[p][0, :, q:q + lout]            # (TC, lout), contiguous
        mx = w if mx is None else jnp.maximum(mx, w)
        sm = w if sm is None else sm + w
    out_ref[0, 0, :, :] = mx
    out_ref[0, 1, :, :] = sm * (1.0 / kernel_size)     # AvgPool1d divides by K


# ------------------------------- wrapper -----------------------------------

def _pick_channel_tile(n_channels, per_channel_bytes, budget_bytes=2 * 1024 * 1024):
    """Largest channel tile that is a multiple of 8 sublanes dividing C (or C
    itself) while keeping one block's VMEM footprint under ~budget_bytes."""
    if n_channels % 8 != 0 or n_channels * per_channel_bytes <= budget_bytes:
        return n_channels
    tc = min(n_channels, max(8, (budget_bytes // per_channel_bytes) // 8 * 8))
    while n_channels % tc:
        tc -= 8
    return tc


@functools.partial(jax.jit, static_argnames=("kernel_size", "stride"))
def mna_pooling(x, kernel_size=3, stride=2):
    """MNAPooling: concat([MaxPool1d(k,s)(x), AvgPool1d(k,s)(x)], dim=1).

    x: (B, C, L) -> (B, 2*C, Lout) with Lout = (L - k) // s + 1.
    """
    B, C, L = x.shape
    K, S = kernel_size, stride
    assert K >= 1 and S >= 1 and L >= K
    lout = (L - K) // S + 1

    # De-interleave x into its stride phases once (each element appears in
    # exactly one phase -> the kernel reads x exactly once, with no K-fold
    # window duplication in HBM).  Only phases touched by some window offset
    # j in [0, K) are materialized.
    n_phases = min(S, K)
    phases = [x[:, :, p::S] for p in range(n_phases)]

    itemsize = jnp.dtype(x.dtype).itemsize
    per_channel_bytes = (sum(ph.shape[-1] for ph in phases) + 2 * lout) * itemsize
    tc = _pick_channel_tile(C, per_channel_bytes)
    grid = (B, C // tc)

    in_specs = [
        pl.BlockSpec((1, tc, ph.shape[-1]), lambda b, c: (b, c, 0))
        for ph in phases
    ]
    # One output holding both poolings: (B, 2, C, Lout).  Reshaping it below
    # to (B, 2C, Lout) is contiguous, i.e. the PyTorch channel-concat is free.
    out_specs = pl.BlockSpec((1, 2, tc, lout), lambda b, c: (b, 0, c, 0))

    out = pl.pallas_call(
        functools.partial(_mna_pool_kernel, kernel_size=K, stride=S, lout=lout),
        out_shape=jax.ShapeDtypeStruct((B, 2, C, lout), x.dtype),
        grid=grid,
        in_specs=in_specs,
        out_specs=out_specs,
        compiler_params=pltpu.CompilerParams(
            dimension_semantics=("parallel", "parallel"),
            vmem_limit_bytes=32 * 1024 * 1024,
        ),
    )(*phases)
    return out.reshape(B, 2 * C, lout)


# --------------------------- pure-JAX reference -----------------------------

def mna_pooling_reference(x, kernel_size=3, stride=2):
    B, C, L = x.shape
    lout = (L - kernel_size) // stride + 1
    span = stride * (lout - 1) + 1
    wins = jnp.stack(
        [x[:, :, j:j + span:stride] for j in range(kernel_size)], axis=-1)
    return jnp.concatenate([wins.max(axis=-1), wins.mean(axis=-1)], axis=1)


if __name__ == "__main__":
    key = jax.random.PRNGKey(0)
    B, C, L = 2, 16, 64                     # small shapes; any (B, C, L>=3) works
    x = jax.random.normal(key, (B, C, L), jnp.float32)

    out = mna_pooling(x)
    out = jax.block_until_ready(out)

    lout = (L - 3) // 2 + 1
    assert out.shape == (B, 2 * C, lout), out.shape
    ref = mna_pooling_reference(x)
    assert jnp.allclose(out, ref, atol=1e-5, rtol=1e-5), float(
        jnp.max(jnp.abs(out - ref)))
    assert bool(jnp.all(jnp.isfinite(out)))
    print("KERNEL_OK")
</pallas_src>

<mosaic_0001>
module attributes {stable_mosaic.version = 11 : i64} {
  func.func @_mna_pool_kernel(%arg0: i32, %arg1: i32, %arg2: memref<1x16x32xf32, #tpu.memory_space<vmem>>, %arg3: memref<1x16x32xf32, #tpu.memory_space<vmem>>, %arg4: memref<1x2x16x31xf32, #tpu.memory_space<vmem>>) attributes {dimension_semantics = [#tpu.dimension_semantics<parallel>, #tpu.dimension_semantics<parallel>], iteration_bounds = array<i64: 2, 1>, scalar_prefetch = 0 : i64, scratch_operands = 0 : i64, tpu.core_type = #tpu.core_type<tc>, window_params = [{transform_indices = @transform_0, window_bounds = array<i64: 1, 16, 32>}, {transform_indices = @transform_1, window_bounds = array<i64: 1, 16, 32>}, {transform_indices = @transform_2, window_bounds = array<i64: 1, 2, 16, 31>}]} {
    %c0 = arith.constant 0 : index
    %c0_0 = arith.constant 0 : index
    %c0_1 = arith.constant 0 : index
    %0 = vector.load %arg2[%c0, %c0_0, %c0_1] : memref<1x16x32xf32, #tpu.memory_space<vmem>>, vector<1x16x31xf32>
    %1 = vector.shape_cast %0 : vector<1x16x31xf32> to vector<16x31xf32>
    %c0_2 = arith.constant 0 : index
    %c0_3 = arith.constant 0 : index
    %c0_4 = arith.constant 0 : index
    %2 = vector.load %arg3[%c0_2, %c0_3, %c0_4] : memref<1x16x32xf32, #tpu.memory_space<vmem>>, vector<1x16x31xf32>
    %3 = vector.shape_cast %2 : vector<1x16x31xf32> to vector<16x31xf32>
    %4 = arith.maximumf %1, %3 : vector<16x31xf32>
    %5 = arith.addf %1, %3 : vector<16x31xf32>
    %c0_5 = arith.constant 0 : index
    %c0_6 = arith.constant 0 : index
    %c1 = arith.constant 1 : index
    %6 = vector.load %arg2[%c0_5, %c0_6, %c1] : memref<1x16x32xf32, #tpu.memory_space<vmem>>, vector<1x16x31xf32>
    %7 = vector.shape_cast %6 : vector<1x16x31xf32> to vector<16x31xf32>
    %8 = arith.maximumf %4, %7 : vector<16x31xf32>
    %9 = arith.addf %5, %7 : vector<16x31xf32>
    %c0_7 = arith.constant 0 : index
    %c0_8 = arith.constant 0 : index
    %c0_9 = arith.constant 0 : index
    %c0_10 = arith.constant 0 : index
    %10 = vector.load %arg4[%c0_7, %c0_8, %c0_9, %c0_10] : memref<1x2x16x31xf32, #tpu.memory_space<vmem>>, vector<1x1x16x31xf32>
    %11 = vector.shape_cast %10 : vector<1x1x16x31xf32> to vector<16x31xf32>
    %12 = vector.shape_cast %8 : vector<16x31xf32> to vector<1x1x16x31xf32>
    tpu.vector_store %arg4[%c0_7, %c0_8, %c0_9, %c0_10], %12 {strides = array<i32>} : memref<1x2x16x31xf32, #tpu.memory_space<vmem>>, vector<1x1x16x31xf32>,
    %cst = arith.constant 0.333333343 : f32
    %13 = vector.broadcast %cst : f32 to vector<16x31xf32>
    %14 = arith.mulf %9, %13 : vector<16x31xf32>
    %c0_11 = arith.constant 0 : index
    %c1_12 = arith.constant 1 : index
    %c0_13 = arith.constant 0 : index
    %c0_14 = arith.constant 0 : index
    %15 = vector.load %arg4[%c0_11, %c1_12, %c0_13, %c0_14] : memref<1x2x16x31xf32, #tpu.memory_space<vmem>>, vector<1x1x16x31xf32>
    %16 = vector.shape_cast %15 : vector<1x1x16x31xf32> to vector<16x31xf32>
    %17 = vector.shape_cast %14 : vector<16x31xf32> to vector<1x1x16x31xf32>
    tpu.vector_store %arg4[%c0_11, %c1_12, %c0_13, %c0_14], %17 {strides = array<i32>} : memref<1x2x16x31xf32, #tpu.memory_space<vmem>>, vector<1x1x16x31xf32>,
    return
  }
  func.func @transform_0(%arg0: i32, %arg1: i32) -> (i32, i32, i32) {
    %c0_i32 = arith.constant 0 : i32
    %c0_i32_0 = arith.constant 0 : i32
    return %arg0, %arg1, %c0_i32 : i32, i32, i32
  }
  func.func @transform_1(%arg0: i32, %arg1: i32) -> (i32, i32, i32) {
    %c0_i32 = arith.constant 0 : i32
    %c0_i32_0 = arith.constant 0 : i32
    return %arg0, %arg1, %c0_i32 : i32, i32, i32
  }
  func.func @transform_2(%arg0: i32, %arg1: i32) -> (i32, i32, i32, i32) {
    %c0_i32 = arith.constant 0 : i32
    %c0_i32_0 = arith.constant 0 : i32
    %c0_i32_1 = arith.constant 0 : i32
    return %arg0, %c0_i32, %arg1, %c0_i32_0 : i32, i32, i32, i32
  }
}

</mosaic_0001>

<llo_original>
// kernel: mna_pooling.1
$region0: #{mna_pooling.1}
  #allocation0 [shape = 'u32[]', space=smem, size = 0x4, offset = 0x4, fixed_abs, tag = 'smem constant byte address 0x4 - core index']
  #allocation1 [shape = 'u32[72,128]{1,0:T(1,128)}', space=vmem, size = 0x9000, scoped, tag = 'internal scratch']
  %s0 = inlined_call_operand.vmem [shape: f32[2,16,32], index: 0, kind: input, shape index: {}]
  %s1 = inlined_call_operand.vmem [shape: f32[2,16,32], index: 1, kind: input, shape index: {}]
  %s2 = inlined_call_operand.vmem [shape: f32[2,2,16,31], index: 2, kind: output, shape index: {}]
  %s3 = sld [smem:[#allocation0]]
  $region41: #{mna_pooling.1} parent=0
    _
  %s5 = ssub.s32 1, %s3
  %s6 = scalar_select 0, %s5, %s3
  loop: start=0, step=1, limit=4
  $region2: #{mna_pooling.1} parent=0 // loop_pre_header
    _
  $region3: #{mna_pooling.1} parent=0 // loop_header
    %s8 = sphi 0, %s12
    %p9 = scmp.ge.s32.totalorder %s8, 4
    %s15 = sphi 0, %s27
    %s16 = sphi 0, %s23
    %s17 = sphi 0, %s15
    %s18 = sphi 0, %s16
    %s19 = sphi 0, %s17
    %s20 = sphi 0, %s18
    %s32 = sphi 0, %s34
    %s35 = sphi 0, %s32
    %s36 = sphi 0, %s35
    %s52 = sphi 0, %s36
    %s60 = sphi 0, %s62
    %s63 = sphi 0, %s60
    %s64 = sphi 0, %s63
    %s80 = sphi 0, %s64
    %s88 = sphi 0, %s90
    %s91 = sphi 0, %s88
    %s92 = sphi 0, %s91
    %s108 = sphi 0, %s92
  $region4: #{mna_pooling.1} parent=0 // loop_header_branch
    %11 = sbr.rel (%p9) target = $region8
  $region5: #{mna_pooling.1} parent=0 // loop_body
    %s13 = ssub.s32 %s8, 1
    %s14 = ssub.s32 %s8, 2
    %s21 = sadd.s32 1, %s16
    %p22 = scmp.ge.s32.totalorder %s21, 1
    %s23 = scalar_select %p22, 0, %s21
    %s24 = sadd.s32 1, %s15
    %s25 = scalar_select %p22, %s24, %s15
    %p26 = scmp.ge.s32.totalorder %s25, 2
    %s27 = scalar_select %p26, 0, %s25
    %s28 = ssub.s32 %s15, %s27
    %s29 = ssub.s32 %s16, %s23
    %s30 = sor.u32 %s28, %s29
    %p31 = scmp.eq.s32.totalorder %s30, 0
    %s33 = sadd.s32 %s32, 1
    %s34 = scalar_select %p31, %s32, %s33
    %p37 = pneg %p31
    %p38 = scmp.eq.s32.totalorder %s8, 1
    %p39 = por %p37, %p38
    %p40 = scmp.ne.s32.totalorder %s32, %s35
    %p41 = scmp.eq.s32.totalorder %s8, 0
    %p42 = por %p40, %p41
    %p43 = scmp.ne.s32.totalorder %s32, %s35
    %p44 = scmp.eq.s32.totalorder %s13, 1
    %p45 = por %p43, %p44
    %p46 = scmp.ne.s32.totalorder %s35, %s36
    %p47 = scmp.eq.s32.totalorder %s13, 0
    %p48 = por %p46, %p47
    %p49 = scmp.ne.s32.totalorder %s35, %s36
    %p50 = scmp.eq.s32.totalorder %s14, 1
    %p51 = por %p49, %p50
    %p53 = scmp.ne.s32.totalorder %s36, %s52
    %p54 = scmp.eq.s32.totalorder %s14, 0
    %p55 = por %p53, %p54
    %s56 = ssub.s32 %s15, %s27
    %s57 = ssub.s32 %s16, %s23
    %s58 = sor.u32 %s56, %s57
    %p59 = scmp.eq.s32.totalorder %s58, 0
    %s61 = sadd.s32 %s60, 1
    %s62 = scalar_select %p59, %s60, %s61
    %p65 = pneg %p59
    %p66 = scmp.eq.s32.totalorder %s8, 1
    %p67 = por %p65, %p66
    %p68 = scmp.ne.s32.totalorder %s60, %s63
    %p69 = scmp.eq.s32.totalorder %s8, 0
    %p70 = por %p68, %p69
    %p71 = scmp.ne.s32.totalorder %s60, %s63
    %p72 = scmp.eq.s32.totalorder %s13, 1
    %p73 = por %p71, %p72
    %p74 = scmp.ne.s32.totalorder %s63, %s64
    %p75 = scmp.eq.s32.totalorder %s13, 0
    %p76 = por %p74, %p75
    %p77 = scmp.ne.s32.totalorder %s63, %s64
    %p78 = scmp.eq.s32.totalorder %s14, 1
    %p79 = por %p77, %p78
    %p81 = scmp.ne.s32.totalorder %s64, %s80
    %p82 = scmp.eq.s32.totalorder %s14, 0
    %p83 = por %p81, %p82
    %s84 = ssub.s32 %s15, %s27
    %s85 = ssub.s32 %s16, %s23
    %s86 = sor.u32 %s84, %s85
    %p87 = scmp.eq.s32.totalorder %s86, 0
    %s89 = sadd.s32 %s88, 1
    %s90 = scalar_select %p87, %s88, %s89
    %p93 = pneg %p87
    %p94 = scmp.eq.s32.totalorder %s8, 1
    %p95 = por %p93, %p94
    %p96 = scmp.ne.s32.totalorder %s88, %s91
    %p97 = scmp.eq.s32.totalorder %s8, 0
    %p98 = por %p96, %p97
    %p99 = scmp.ne.s32.totalorder %s88, %s91
    %p100 = scmp.eq.s32.totalorder %s13, 1
    %p101 = por %p99, %p100
    %p102 = scmp.ne.s32.totalorder %s91, %s92
    %p103 = scmp.eq.s32.totalorder %s13, 0
    %p104 = por %p102, %p103
    %p105 = scmp.ne.s32.totalorder %s91, %s92
    %p106 = scmp.eq.s32.totalorder %s14, 1
    %p107 = por %p105, %p106
    %p109 = scmp.ne.s32.totalorder %s92, %s108
    %p110 = scmp.eq.s32.totalorder %s14, 0
    %p111 = por %p109, %p110
    %p112 = scmp.le.s32.totalorder 1, %s8
    %p113 = scmp.lt.s32.totalorder %s8, 3
    %p114 = pnand %p112, %p113
    %p115 = pneg %p114
    // Predicated region
    $region9: #{mna_pooling.1} parent=5 // pred_check
      _
    $region10: #{mna_pooling.1} parent=5 // pred_check_branch
      %117 = sbr.rel (%p114) target = $region12
    $region11: #{mna_pooling.1} parent=5 // pred_region
      %s118 = ssub.s32 %s8, 1
    $region12: #{mna_pooling.1} parent=5 // pred_fallthru
      _
    %p119 = scmp.lt.s32.totalorder %s8, 2
    // Predicated region
    $region13: #{mna_pooling.1} parent=5 // pred_check
      %p120 = pneg %p119
    $region14: #{mna_pooling.1} parent=5 // pred_check_branch
      %122 = sbr.rel (%p120) target = $region16
    $region15: #{mna_pooling.1} parent=5 // pred_region
      // Predicated region
      $region17: #{mna_pooling.1} parent=15 // pred_check
        %p123 = pneg %p42
      $region18: #{mna_pooling.1} parent=15 // pred_check_branch
        %125 = sbr.rel (%p123) target = $region20
      $region19: #{mna_pooling.1} parent=15 // pred_region
        %s126 = smul.u32 2, %s16
        %p127 = scmp.lt.s32.totalorder %s15, 1
        %s128 = scalar_select %p127, %s15, 1
        %p129 = scmp.lt.s32.totalorder %s126, 1
        %s130 = scalar_select %p129, %s126, 1
        %s131 = smul.addr %s128, 2
        %s132 = sadd.s32 %s130, %s131
        %s133 = smul.addr %s132, 8
        %s134 = scalar_lea.vmem %s0, %s133
        %s135 = smul.u32 2, %s16
      $region20: #{mna_pooling.1} parent=15 // pred_fallthru
        _
      // Predicated region
      $region21: #{mna_pooling.1} parent=15 // pred_check
        %p136 = pneg %p70
      $region22: #{mna_pooling.1} parent=15 // pred_check_branch
        %138 = sbr.rel (%p136) target = $region24
      $region23: #{mna_pooling.1} parent=15 // pred_region
        %s139 = smul.u32 2, %s16
        %p140 = scmp.lt.s32.totalorder %s15, 1
        %s141 = scalar_select %p140, %s15, 1
        %p142 = scmp.lt.s32.totalorder %s139, 1
        %s143 = scalar_select %p142, %s139, 1
        %s144 = smul.addr %s141, 2
        %s145 = sadd.s32 %s143, %s144
        %s146 = smul.addr %s145, 8
        %s147 = scalar_lea.vmem %s1, %s146
        %s148 = smul.u32 2, %s16
      $region24: #{mna_pooling.1} parent=15 // pred_fallthru
        _
    $region16: #{mna_pooling.1} parent=5 // pred_fallthru
      _
    %p149 = scmp.le.s32.totalorder 1, %s8
    %p150 = scmp.lt.s32.totalorder %s8, 3
    %p151 = pnand %p149, %p150
    %p152 = pneg %p151
    // Predicated region
    $region25: #{mna_pooling.1} parent=5 // pred_check
      _
    $region26: #{mna_pooling.1} parent=5 // pred_check_branch
      %154 = sbr.rel (%p151) target = $region28
    $region27: #{mna_pooling.1} parent=5 // pred_region
      %s155 = ssub.s32 %s8, 1
      %s156 = smul.u32 2, %s18
      %p157 = scmp.lt.s32.totalorder %s17, 1
      %s158 = scalar_select %p157, %s17, 1
      %p159 = scmp.lt.s32.totalorder %s156, 1
      %s160 = scalar_select %p159, %s156, 1
      %s161 = smul.addr %s158, 2
      %s162 = sadd.s32 %s160, %s161
      %s163 = smul.addr %s162, 8
      %s164 = scalar_lea.vmem %s0, %s163
      %p165 = pneg %p48
      %p166 = pneg %p45
      %s167 = smul.u32 2, %s18
      %p168 = scmp.lt.s32.totalorder %s17, 1
      %s169 = scalar_select %p168, %s17, 1
      %p170 = scmp.lt.s32.totalorder %s167, 1
      %s171 = scalar_select %p170, %s167, 1
      %s172 = smul.addr %s169, 2
      %s173 = sadd.s32 %s171, %s172
      %s174 = smul.addr %s173, 8
      %s175 = scalar_lea.vmem %s1, %s174
      %p176 = pneg %p76
      %p177 = pneg %p73
      %p178 = pneg %p104
      %p179 = pneg %p101
      %s180 = smul.u32 2, %s18
      %p181 = scmp.lt.s32.totalorder %s17, 1
      %s182 = scalar_select %p181, %s17, 1
      %p183 = scmp.lt.s32.totalorder %s180, 1
      %s184 = scalar_select %p183, %s180, 1
      %s185 = smul.addr %s182, 4
      %s186 = sadd.s32 %s184, %s185
      %s187 = smul.addr %s186, 8
      %s188 = scalar_lea.vmem %s2, %s187
      %s189 = smul.u32 2, %s18
      %p190 = scmp.lt.s32.totalorder %s17, 1
      %s191 = scalar_select %p190, %s17, 1
      %p192 = scmp.lt.s32.totalorder %s189, 1
      %s193 = scalar_select %p192, %s189, 1
      %s194 = smul.addr %s191, 2
      %s195 = sadd.s32 %s193, %s194
      %s196 = smul.addr %s195, 8
      %s197 = scalar_lea.vmem %s0, %s196
      %s198 = smul.u32 2, %s18
      %s199 = smul.u32 2, %s18
      %p200 = scmp.lt.s32.totalorder %s17, 1
      %s201 = scalar_select %p200, %s17, 1
      %p202 = scmp.lt.s32.totalorder %s199, 1
      %s203 = scalar_select %p202, %s199, 1
      %s204 = smul.addr %s201, 2
      %s205 = sadd.s32 %s203, %s204
      %s206 = smul.addr %s205, 8
      %s207 = scalar_lea.vmem %s1, %s206
      %s208 = smul.u32 2, %s18
      %s209 = smul.u32 2, %s18
      %p210 = scmp.lt.s32.totalorder %s17, 1
      %s211 = scalar_select %p210, %s17, 1
      %p212 = scmp.lt.s32.totalorder %s209, 1
      %s213 = scalar_select %p212, %s209, 1
      %s214 = smul.addr %s211, 4
      %s215 = sadd.s32 %s213, %s214
      %s216 = smul.addr %s215, 8
      %s217 = scalar_lea.vmem %s2, %s216
      %s218 = smul.u32 2, %s18
      %v219 = vld [vmem:[%s197] sm:$0xff]
      %v220 = vld [vmem:[%s197 + $0x8] sm:$0xff]
      %v221 = vld [vmem:[%s207] sm:$0xff]
      %v222 = vld [vmem:[%s207 + $0x8] sm:$0xff]
      %v223 = vmax.f32 %v219, %v221
      %v224 = vmax.f32 %v220, %v222
      %v225 = vadd.f32 %v219, %v221
      %v226 = vadd.f32 %v220, %v222
      %229 = vrot.lane.b32.xlu0 %v219, 127
      %v230 = vpop.permute.xlu0 %229
      %231 = vrot.lane.b32.xlu0 %v220, 127
      %v232 = vpop.permute.xlu0 %231
      %v235 = vmax.f32 %v223, %v230
      %v236 = vmax.f32 %v224, %v232
      %v237 = vadd.f32 %v225, %v230
      %v238 = vadd.f32 %v226, %v232
      %vm239 = vcmask 252928
      %240 = vst.msk [vmem:[%s217] sm:$0xff] %vm239, %v235
      %241 = vst.msk [vmem:[%s217 + $0x8] sm:$0xff] %vm239, %v236
      %v242 = vmul.f32 %v237, 0.33333334
      %v243 = vmul.f32 %v238, 0.33333334
      %s244 = scalar_lea.vmem %s217, 16
      %245 = vst.msk [vmem:[%s244] sm:$0xff] %vm239, %v242
      %246 = vst.msk [vmem:[%s244 + $0x8] sm:$0xff] %vm239, %v243
      %s247 = smul.u32 2, %s18
      %p248 = scmp.lt.s32.totalorder %s17, 1
      %s249 = scalar_select %p248, %s17, 1
      %p250 = scmp.lt.s32.totalorder %s247, 1
      %s251 = scalar_select %p250, %s247, 1
      %s252 = smul.addr %s249, 4
      %s253 = sadd.s32 %s251, %s252
      %s254 = smul.addr %s253, 8
      %s255 = scalar_lea.vmem %s2, %s254
      // Predicated region
      $region29: #{mna_pooling.1} parent=27 // pred_check
        %p256 = pneg %p101
      $region30: #{mna_pooling.1} parent=27 // pred_check_branch
        %258 = sbr.rel (%p256) target = $region32
      $region31: #{mna_pooling.1} parent=27 // pred_region
        %s259 = smul.u32 2, %s18
      $region32: #{mna_pooling.1} parent=27 // pred_fallthru
        _
    $region28: #{mna_pooling.1} parent=5 // pred_fallthru
      _
    %p260 = scmp.le.s32.totalorder 2, %s8
    // Predicated region
    $region33: #{mna_pooling.1} parent=5 // pred_check
      %p261 = pneg %p260
    $region34: #{mna_pooling.1} parent=5 // pred_check_branch
      %263 = sbr.rel (%p261) target = $region36
    $region35: #{mna_pooling.1} parent=5 // pred_region
      %s264 = ssub.s32 %s8, 2
      // Predicated region
      $region37: #{mna_pooling.1} parent=35 // pred_check
        %p265 = pneg %p107
      $region38: #{mna_pooling.1} parent=35 // pred_check_branch
        %267 = sbr.rel (%p265) target = $region40
      $region39: #{mna_pooling.1} parent=35 // pred_region
        %s268 = smul.u32 2, %s20
        %p269 = scmp.lt.s32.totalorder %s19, 1
        %s270 = scalar_select %p269, %s19, 1
        %p271 = scmp.lt.s32.totalorder %s268, 1
        %s272 = scalar_select %p271, %s268, 1
        %s273 = smul.addr %s270, 4
        %s274 = sadd.s32 %s272, %s273
        %s275 = smul.addr %s274, 8
        %s276 = scalar_lea.vmem %s2, %s275
      $region40: #{mna_pooling.1} parent=35 // pred_fallthru
        _
    $region36: #{mna_pooling.1} parent=5 // pred_fallthru
      _
  $region6: #{mna_pooling.1} parent=0 // loop_footer
    %s12 = sadd.s32 1, %s8
  $region7: #{mna_pooling.1} parent=0 // loop_footer_branch
    %7 = sbr.rel target = $region3
  $region8: #{mna_pooling.1} parent=0 // loop_exit
    _

</llo_original>
